<compile_context>
chip_gen: v5e
topology: v5e:2x2
jax: 0.10.0
libtpu: 0.0.40
codegen_flags: <defaults>
</compile_context>

<pallas_src>
import functools

import jax
import jax.numpy as jnp
from jax import lax
from jax.experimental import pallas as pl
from jax.experimental.pallas import tpu as pltpu

LANE = 128


def _round_up(x, m):
    return ((x + m - 1) // m) * m


def _ce_dice_kernel(preds_ref, labels_ref, ce_ref, inter_ref, spred_ref, sgt_ref, *,
                    n_classes, s_tile, hw_real, hw_pad):
    h = pl.program_id(1)
    C = n_classes
    S_t = s_tile

    @pl.when(h == 0)
    def _init():
        ce_ref[...] = jnp.zeros_like(ce_ref)
        inter_ref[...] = jnp.zeros_like(inter_ref)
        spred_ref[...] = jnp.zeros_like(spred_ref)
        sgt_ref[...] = jnp.zeros_like(sgt_ref)

    p = preds_ref[0].astype(jnp.float32)      # (C, S_t, 128)
    lab = labels_ref[0].astype(jnp.float32)   # (S_t, 128), integer-valued class ids

    # ---- softmax pieces over the channel (leading) axis: pure VPU reduces ----
    m = jnp.max(p, axis=0)                    # (S_t, 128)
    e = jnp.exp(p - m[None])                  # (C, S_t, 128)   EUP
    se = jnp.sum(e, axis=0)                   # (S_t, 128)
    lse = m + jnp.log(se)                     # (S_t, 128)      EUP
    inv_se = pl.reciprocal(se)                # exact; one reciprocal per pixel
    sm = e * inv_se[None]                     # (C, S_t, 128)

    # ---- cross entropy: logit at the target class via select + channel sum ----
    ch = lax.broadcasted_iota(jnp.int32, (C, S_t, LANE), 0)
    tgt = lab.astype(jnp.int32)[None]                           # (1, S_t, 128)
    logit_t = jnp.sum(jnp.where(ch == tgt, p, 0.0), axis=0)     # (S_t, 128)
    ce_pix = lse - logit_t                                      # (S_t, 128)

    # ---- mask padded pixels (static branch: only when padding exists) ----
    if hw_pad != hw_real:
        sub = lax.broadcasted_iota(jnp.int32, (S_t, LANE), 0)
        ln = lax.broadcasted_iota(jnp.int32, (S_t, LANE), 1)
        pix = (h * S_t + sub) * LANE + ln
        mask = (pix < hw_real).astype(jnp.float32)
        ce_pix = ce_pix * mask
        sm = sm * mask[None]
        lab = lab * mask

    # ---- fold S_t sublanes into 8-sublane accumulators (vreg adds, no XLU) ----
    g = S_t // 8
    ce_ref[0] += ce_pix.reshape(g, 8, LANE).sum(axis=0)                       # (8, 128)
    inter_ref[0] += (sm * lab[None]).reshape(C, g, 8, LANE).sum(axis=1)       # (C, 8, 128)
    spred_ref[0] += sm.reshape(C, g, 8, LANE).sum(axis=1)                     # (C, 8, 128)
    sgt_ref[0] += lab.reshape(g, 8, LANE).sum(axis=0)                         # (8, 128)


def ce_dice_loss_v2(preds, labels, *, weight_ce=1.0, weight_dice=1.0,
                    alpha=0.5, beta=0.5, smooth=1e-4,
                    target_block_bytes=4 * 1024 * 1024):
    """preds: (N, C, H, W) logits; labels: (N, 1, H, W) class ids (float or int)."""
    # NOTE: alpha/beta are unused in the reference forward pass (kept for parity).
    N, C, H, W = preds.shape
    HW = H * W

    # ---- spatial tiling: rows of 128 lanes, tile a multiple of 16 sublanes ----
    S = int(pl.cdiv(HW, LANE))
    itemsize = jnp.dtype(preds.dtype).itemsize
    rows_cap = target_block_bytes // (C * LANE * itemsize)
    rows_cap = max(16, (rows_cap // 16) * 16)
    S_t = int(min(rows_cap, _round_up(S, 16)))
    S_pad = _round_up(S, S_t)
    HW_pad = S_pad * LANE
    n_sp = S_pad // S_t

    preds_r = preds.reshape(N, C, HW)               # keep input dtype (bf16 ok)
    labels_r = labels.reshape(N, HW)
    if HW_pad != HW:
        preds_r = jnp.pad(preds_r, ((0, 0), (0, 0), (0, HW_pad - HW)))
        labels_r = jnp.pad(labels_r, ((0, 0), (0, HW_pad - HW)))
    preds_r = preds_r.reshape(N, C, S_pad, LANE)
    labels_r = labels_r.reshape(N, S_pad, LANE)

    kernel = functools.partial(_ce_dice_kernel, n_classes=C, s_tile=S_t,
                               hw_real=HW, hw_pad=HW_pad)

    out_shapes = (
        jax.ShapeDtypeStruct((N, 8, LANE), jnp.float32),       # per-batch CE partial
        jax.ShapeDtypeStruct((N, C, 8, LANE), jnp.float32),    # per-batch,class intersection
        jax.ShapeDtypeStruct((N, C, 8, LANE), jnp.float32),    # per-batch,class sum_pred
        jax.ShapeDtypeStruct((N, 8, LANE), jnp.float32),       # per-batch sum_gt
    )

    ce_p, inter_p, spred_p, sgt_p = pl.pallas_call(
        kernel,
        out_shape=out_shapes,
        grid=(N, n_sp),
        in_specs=[
            pl.BlockSpec((1, C, S_t, LANE), lambda b, h: (b, 0, h, 0)),
            pl.BlockSpec((1, S_t, LANE), lambda b, h: (b, h, 0)),
        ],
        out_specs=(
            pl.BlockSpec((1, 8, LANE), lambda b, h: (b, 0, 0)),
            pl.BlockSpec((1, C, 8, LANE), lambda b, h: (b, 0, 0, 0)),
            pl.BlockSpec((1, C, 8, LANE), lambda b, h: (b, 0, 0, 0)),
            pl.BlockSpec((1, 8, LANE), lambda b, h: (b, 0, 0)),
        ),
        compiler_params=pltpu.CompilerParams(
            dimension_semantics=("parallel", "arbitrary")),
    )(preds_r, labels_r)

    # ---- tiny JAX epilogue: final reductions + dice combine ----
    loss_ce = jnp.sum(ce_p) / (N * HW)                        # CE 'mean' reduction
    inter = jnp.sum(inter_p, axis=(2, 3))                     # (N, C)
    s_pred = jnp.sum(spred_p, axis=(2, 3))                    # (N, C)
    s_gt = jnp.sum(sgt_p, axis=(1, 2))                        # (N,)
    dice = 2.0 * inter / (s_pred + s_gt[:, None] + smooth)    # (N, C)
    loss_dice = jnp.mean(1.0 - dice)
    return weight_ce * loss_ce + weight_dice * loss_dice


def _reference_loss(preds, labels, *, weight_ce=1.0, weight_dice=1.0, smooth=1e-4):
    """Pure-JAX reference mirroring the PyTorch module."""
    tgt = labels[:, 0].astype(jnp.int32)                       # (N, H, W)
    logz = jax.nn.logsumexp(preds, axis=1)                     # (N, H, W)
    logit_t = jnp.take_along_axis(preds, tgt[:, None], axis=1)[:, 0]
    loss_ce = jnp.mean(logz - logit_t)
    sm = jax.nn.softmax(preds, axis=1)
    inter = jnp.sum(sm * labels, axis=(2, 3))
    sp = jnp.sum(sm, axis=(2, 3))
    sg = jnp.sum(labels, axis=(2, 3))
    dice = 2.0 * inter / (sp + sg + smooth)
    return weight_ce * loss_ce + weight_dice * jnp.mean(1.0 - dice)


if __name__ == "__main__":
    key = jax.random.PRNGKey(0)
    k_preds, k_lab = jax.random.split(key)

    N, C, H, W = 2, 4, 16, 16
    preds = jax.random.normal(k_preds, (N, C, H, W), dtype=jnp.float32)
    label_ids = jax.random.randint(k_lab, (N, 1, H, W), 0, C)
    labels = label_ids.astype(jnp.float32)

    loss = ce_dice_loss_v2(preds, labels)
    loss = jax.block_until_ready(loss)

    ref = _reference_loss(preds, labels)
    assert jnp.allclose(loss, ref, rtol=1e-5, atol=1e-5), (loss, ref)

    print("KERNEL_OK")
</pallas_src>

<mosaic_0001>
module attributes {stable_mosaic.version = 11 : i64} {
  func.func @_ce_dice_kernel(%arg0: i32, %arg1: i32, %arg2: memref<1x4x16x128xf32, #tpu.memory_space<vmem>>, %arg3: memref<1x16x128xf32, #tpu.memory_space<vmem>>, %arg4: memref<1x8x128xf32, #tpu.memory_space<vmem>>, %arg5: memref<1x4x8x128xf32, #tpu.memory_space<vmem>>, %arg6: memref<1x4x8x128xf32, #tpu.memory_space<vmem>>, %arg7: memref<1x8x128xf32, #tpu.memory_space<vmem>>) attributes {dimension_semantics = [#tpu.dimension_semantics<parallel>, #tpu.dimension_semantics<arbitrary>], iteration_bounds = array<i64: 2, 1>, scalar_prefetch = 0 : i64, scratch_operands = 0 : i64, tpu.core_type = #tpu.core_type<tc>, window_params = [{transform_indices = @transform_0, window_bounds = array<i64: 1, 4, 16, 128>}, {transform_indices = @transform_1, window_bounds = array<i64: 1, 16, 128>}, {transform_indices = @transform_2, window_bounds = array<i64: 1, 8, 128>}, {transform_indices = @transform_3, window_bounds = array<i64: 1, 4, 8, 128>}, {transform_indices = @transform_4, window_bounds = array<i64: 1, 4, 8, 128>}, {transform_indices = @transform_5, window_bounds = array<i64: 1, 8, 128>}]} {
    %c0_i32 = arith.constant 0 : i32
    %0 = arith.cmpi eq, %arg1, %c0_i32 : i32
    %1 = arith.extui %0 : i1 to i32
    %c0_i32_0 = arith.constant 0 : i32
    %2 = arith.cmpi ne, %1, %c0_i32_0 : i32
    scf.if %2 {
      %cst_42 = arith.constant 0.000000e+00 : f32
      %80 = vector.broadcast %cst_42 : f32 to vector<1x8x128xf32>
      %c0_43 = arith.constant 0 : index
      %c0_44 = arith.constant 0 : index
      %c0_45 = arith.constant 0 : index
      %81 = vector.load %arg4[%c0_43, %c0_44, %c0_45] : memref<1x8x128xf32, #tpu.memory_space<vmem>>, vector<1x8x128xf32>
      tpu.vector_store %arg4[%c0_43, %c0_44, %c0_45], %80 {strides = array<i32>} : memref<1x8x128xf32, #tpu.memory_space<vmem>>, vector<1x8x128xf32>,
      %cst_46 = arith.constant 0.000000e+00 : f32
      %82 = vector.broadcast %cst_46 : f32 to vector<1x4x8x128xf32>
      %c0_47 = arith.constant 0 : index
      %c0_48 = arith.constant 0 : index
      %c0_49 = arith.constant 0 : index
      %c0_50 = arith.constant 0 : index
      %83 = vector.load %arg5[%c0_47, %c0_48, %c0_49, %c0_50] : memref<1x4x8x128xf32, #tpu.memory_space<vmem>>, vector<1x4x8x128xf32>
      tpu.vector_store %arg5[%c0_47, %c0_48, %c0_49, %c0_50], %82 {strides = array<i32>} : memref<1x4x8x128xf32, #tpu.memory_space<vmem>>, vector<1x4x8x128xf32>,
      %cst_51 = arith.constant 0.000000e+00 : f32
      %84 = vector.broadcast %cst_51 : f32 to vector<1x4x8x128xf32>
      %c0_52 = arith.constant 0 : index
      %c0_53 = arith.constant 0 : index
      %c0_54 = arith.constant 0 : index
      %c0_55 = arith.constant 0 : index
      %85 = vector.load %arg6[%c0_52, %c0_53, %c0_54, %c0_55] : memref<1x4x8x128xf32, #tpu.memory_space<vmem>>, vector<1x4x8x128xf32>
      tpu.vector_store %arg6[%c0_52, %c0_53, %c0_54, %c0_55], %84 {strides = array<i32>} : memref<1x4x8x128xf32, #tpu.memory_space<vmem>>, vector<1x4x8x128xf32>,
      %cst_56 = arith.constant 0.000000e+00 : f32
      %86 = vector.broadcast %cst_56 : f32 to vector<1x8x128xf32>
      %c0_57 = arith.constant 0 : index
      %c0_58 = arith.constant 0 : index
      %c0_59 = arith.constant 0 : index
      %87 = vector.load %arg7[%c0_57, %c0_58, %c0_59] : memref<1x8x128xf32, #tpu.memory_space<vmem>>, vector<1x8x128xf32>
      tpu.vector_store %arg7[%c0_57, %c0_58, %c0_59], %86 {strides = array<i32>} : memref<1x8x128xf32, #tpu.memory_space<vmem>>, vector<1x8x128xf32>,
    } else {
    }
    %c0 = arith.constant 0 : index
    %c0_1 = arith.constant 0 : index
    %c0_2 = arith.constant 0 : index
    %c0_3 = arith.constant 0 : index
    %3 = vector.load %arg2[%c0, %c0_1, %c0_2, %c0_3] : memref<1x4x16x128xf32, #tpu.memory_space<vmem>>, vector<1x4x16x128xf32>
    %4 = vector.shape_cast %3 : vector<1x4x16x128xf32> to vector<4x16x128xf32>
    %c0_4 = arith.constant 0 : index
    %c0_5 = arith.constant 0 : index
    %c0_6 = arith.constant 0 : index
    %5 = vector.load %arg3[%c0_4, %c0_5, %c0_6] : memref<1x16x128xf32, #tpu.memory_space<vmem>>, vector<1x16x128xf32>
    %6 = vector.shape_cast %5 : vector<1x16x128xf32> to vector<16x128xf32>
    %cst = arith.constant dense<0xFF800000> : vector<16x128xf32>
    %7 = vector.multi_reduction <maximumf>, %4, %cst [0] : vector<4x16x128xf32> to vector<16x128xf32>
    %8 = vector.shape_cast %7 : vector<16x128xf32> to vector<1x16x128xf32>
    %9 = vector.broadcast %8 : vector<1x16x128xf32> to vector<4x16x128xf32>
    %10 = arith.subf %4, %9 : vector<4x16x128xf32>
    %11 = math.exp %10 : vector<4x16x128xf32>
    %cst_7 = arith.constant dense<0.000000e+00> : vector<16x128xf32>
    %12 = vector.multi_reduction <add>, %11, %cst_7 [0] : vector<4x16x128xf32> to vector<16x128xf32>
    %13 = math.log %12 : vector<16x128xf32>
    %14 = arith.addf %7, %13 : vector<16x128xf32>
    %15 = tpu.reciprocal %12 : vector<16x128xf32> -> vector<16x128xf32>
    %16 = vector.shape_cast %15 : vector<16x128xf32> to vector<1x16x128xf32>
    %17 = vector.broadcast %16 : vector<1x16x128xf32> to vector<4x16x128xf32>
    %18 = arith.mulf %11, %17 : vector<4x16x128xf32>
    %19 = tpu.iota {dimensions = array<i32: 0>} : vector<4x16x128xi32>
    %20 = arith.fptosi %6 : vector<16x128xf32> to vector<16x128xi32>
    %21 = vector.shape_cast %20 : vector<16x128xi32> to vector<1x16x128xi32>
    %22 = vector.broadcast %21 : vector<1x16x128xi32> to vector<4x16x128xi32>
    %23 = arith.cmpi eq, %19, %22 : vector<4x16x128xi32>
    %cst_8 = arith.constant 0.000000e+00 : f32
    %24 = vector.broadcast %cst_8 : f32 to vector<4x16x128xf32>
    %25 = arith.select %23, %4, %24 : vector<4x16x128xi1>, vector<4x16x128xf32>
    %cst_9 = arith.constant dense<0.000000e+00> : vector<16x128xf32>
    %26 = vector.multi_reduction <add>, %25, %cst_9 [0] : vector<4x16x128xf32> to vector<16x128xf32>
    %27 = arith.subf %14, %26 : vector<16x128xf32>
    %28 = tpu.iota {dimensions = array<i32: 0>} : vector<16x128xi32>
    %29 = tpu.iota {dimensions = array<i32: 1>} : vector<16x128xi32>
    %c16_i32 = arith.constant 16 : i32
    %30 = arith.muli %arg1, %c16_i32 : i32
    %31 = vector.broadcast %30 : i32 to vector<16x128xi32>
    %32 = arith.addi %31, %28 : vector<16x128xi32>
    %c128_i32 = arith.constant 128 : i32
    %33 = vector.broadcast %c128_i32 : i32 to vector<16x128xi32>
    %34 = arith.muli %32, %33 : vector<16x128xi32>
    %35 = arith.addi %34, %29 : vector<16x128xi32>
    %c256_i32 = arith.constant 256 : i32
    %36 = vector.broadcast %c256_i32 : i32 to vector<16x128xi32>
    %37 = arith.cmpi slt, %35, %36 : vector<16x128xi32>
    %38 = arith.extui %37 : vector<16x128xi1> to vector<16x128xi32>
    %39 = arith.sitofp %38 : vector<16x128xi32> to vector<16x128xf32>
    %40 = arith.mulf %27, %39 : vector<16x128xf32>
    %41 = vector.shape_cast %39 : vector<16x128xf32> to vector<1x16x128xf32>
    %42 = vector.broadcast %41 : vector<1x16x128xf32> to vector<4x16x128xf32>
    %43 = arith.mulf %18, %42 : vector<4x16x128xf32>
    %44 = arith.mulf %6, %39 : vector<16x128xf32>
    %c0_10 = arith.constant 0 : index
    %c0_11 = arith.constant 0 : index
    %c0_12 = arith.constant 0 : index
    %45 = vector.load %arg4[%c0_10, %c0_11, %c0_12] : memref<1x8x128xf32, #tpu.memory_space<vmem>>, vector<1x8x128xf32>
    %46 = vector.shape_cast %45 : vector<1x8x128xf32> to vector<8x128xf32>
    %47 = vector.shape_cast %40 : vector<16x128xf32> to vector<2x8x128xf32>
    %cst_13 = arith.constant dense<0.000000e+00> : vector<8x128xf32>
    %48 = vector.multi_reduction <add>, %47, %cst_13 [0] : vector<2x8x128xf32> to vector<8x128xf32>
    %49 = arith.addf %46, %48 : vector<8x128xf32>
    %c0_14 = arith.constant 0 : index
    %c0_15 = arith.constant 0 : index
    %c0_16 = arith.constant 0 : index
    %50 = vector.load %arg4[%c0_14, %c0_15, %c0_16] : memref<1x8x128xf32, #tpu.memory_space<vmem>>, vector<1x8x128xf32>
    %51 = vector.shape_cast %50 : vector<1x8x128xf32> to vector<8x128xf32>
    %52 = vector.shape_cast %49 : vector<8x128xf32> to vector<1x8x128xf32>
    tpu.vector_store %arg4[%c0_14, %c0_15, %c0_16], %52 {strides = array<i32>} : memref<1x8x128xf32, #tpu.memory_space<vmem>>, vector<1x8x128xf32>,
    %c0_17 = arith.constant 0 : index
    %c0_18 = arith.constant 0 : index
    %c0_19 = arith.constant 0 : index
    %c0_20 = arith.constant 0 : index
    %53 = vector.load %arg5[%c0_17, %c0_18, %c0_19, %c0_20] : memref<1x4x8x128xf32, #tpu.memory_space<vmem>>, vector<1x4x8x128xf32>
    %54 = vector.shape_cast %53 : vector<1x4x8x128xf32> to vector<4x8x128xf32>
    %55 = vector.shape_cast %44 : vector<16x128xf32> to vector<1x16x128xf32>
    %56 = vector.broadcast %55 : vector<1x16x128xf32> to vector<4x16x128xf32>
    %57 = arith.mulf %43, %56 : vector<4x16x128xf32>
    %58 = vector.shape_cast %57 : vector<4x16x128xf32> to vector<4x2x8x128xf32>
    %cst_21 = arith.constant dense<0.000000e+00> : vector<4x8x128xf32>
    %59 = vector.multi_reduction <add>, %58, %cst_21 [1] : vector<4x2x8x128xf32> to vector<4x8x128xf32>
    %60 = arith.addf %54, %59 : vector<4x8x128xf32>
    %c0_22 = arith.constant 0 : index
    %c0_23 = arith.constant 0 : index
    %c0_24 = arith.constant 0 : index
    %c0_25 = arith.constant 0 : index
    %61 = vector.load %arg5[%c0_22, %c0_23, %c0_24, %c0_25] : memref<1x4x8x128xf32, #tpu.memory_space<vmem>>, vector<1x4x8x128xf32>
    %62 = vector.shape_cast %61 : vector<1x4x8x128xf32> to vector<4x8x128xf32>
    %63 = vector.shape_cast %60 : vector<4x8x128xf32> to vector<1x4x8x128xf32>
    tpu.vector_store %arg5[%c0_22, %c0_23, %c0_24, %c0_25], %63 {strides = array<i32>} : memref<1x4x8x128xf32, #tpu.memory_space<vmem>>, vector<1x4x8x128xf32>,
    %c0_26 = arith.constant 0 : index
    %c0_27 = arith.constant 0 : index
    %c0_28 = arith.constant 0 : index
    %c0_29 = arith.constant 0 : index
    %64 = vector.load %arg6[%c0_26, %c0_27, %c0_28, %c0_29] : memref<1x4x8x128xf32, #tpu.memory_space<vmem>>, vector<1x4x8x128xf32>
    %65 = vector.shape_cast %64 : vector<1x4x8x128xf32> to vector<4x8x128xf32>
    %66 = vector.shape_cast %43 : vector<4x16x128xf32> to vector<4x2x8x128xf32>
    %cst_30 = arith.constant dense<0.000000e+00> : vector<4x8x128xf32>
    %67 = vector.multi_reduction <add>, %66, %cst_30 [1] : vector<4x2x8x128xf32> to vector<4x8x128xf32>
    %68 = arith.addf %65, %67 : vector<4x8x128xf32>
    %c0_31 = arith.constant 0 : index
    %c0_32 = arith.constant 0 : index
    %c0_33 = arith.constant 0 : index
    %c0_34 = arith.constant 0 : index
    %69 = vector.load %arg6[%c0_31, %c0_32, %c0_33, %c0_34] : memref<1x4x8x128xf32, #tpu.memory_space<vmem>>, vector<1x4x8x128xf32>
    %70 = vector.shape_cast %69 : vector<1x4x8x128xf32> to vector<4x8x128xf32>
    %71 = vector.shape_cast %68 : vector<4x8x128xf32> to vector<1x4x8x128xf32>
    tpu.vector_store %arg6[%c0_31, %c0_32, %c0_33, %c0_34], %71 {strides = array<i32>} : memref<1x4x8x128xf32, #tpu.memory_space<vmem>>, vector<1x4x8x128xf32>,
    %c0_35 = arith.constant 0 : index
    %c0_36 = arith.constant 0 : index
    %c0_37 = arith.constant 0 : index
    %72 = vector.load %arg7[%c0_35, %c0_36, %c0_37] : memref<1x8x128xf32, #tpu.memory_space<vmem>>, vector<1x8x128xf32>
    %73 = vector.shape_cast %72 : vector<1x8x128xf32> to vector<8x128xf32>
    %74 = vector.shape_cast %44 : vector<16x128xf32> to vector<2x8x128xf32>
    %cst_38 = arith.constant dense<0.000000e+00> : vector<8x128xf32>
    %75 = vector.multi_reduction <add>, %74, %cst_38 [0] : vector<2x8x128xf32> to vector<8x128xf32>
    %76 = arith.addf %73, %75 : vector<8x128xf32>
    %c0_39 = arith.constant 0 : index
    %c0_40 = arith.constant 0 : index
    %c0_41 = arith.constant 0 : index
    %77 = vector.load %arg7[%c0_39, %c0_40, %c0_41] : memref<1x8x128xf32, #tpu.memory_space<vmem>>, vector<1x8x128xf32>
    %78 = vector.shape_cast %77 : vector<1x8x128xf32> to vector<8x128xf32>
    %79 = vector.shape_cast %76 : vector<8x128xf32> to vector<1x8x128xf32>
    tpu.vector_store %arg7[%c0_39, %c0_40, %c0_41], %79 {strides = array<i32>} : memref<1x8x128xf32, #tpu.memory_space<vmem>>, vector<1x8x128xf32>,
    return
  }
  func.func @transform_0(%arg0: i32, %arg1: i32) -> (i32, i32, i32, i32) {
    %c0_i32 = arith.constant 0 : i32
    %c0_i32_0 = arith.constant 0 : i32
    %c0_i32_1 = arith.constant 0 : i32
    return %arg0, %c0_i32, %arg1, %c0_i32_0 : i32, i32, i32, i32
  }
  func.func @transform_1(%arg0: i32, %arg1: i32) -> (i32, i32, i32) {
    %c0_i32 = arith.constant 0 : i32
    %c0_i32_0 = arith.constant 0 : i32
    return %arg0, %arg1, %c0_i32 : i32, i32, i32
  }
  func.func @transform_2(%arg0: i32, %arg1: i32) -> (i32, i32, i32) {
    %c0_i32 = arith.constant 0 : i32
    %c0_i32_0 = arith.constant 0 : i32
    %c0_i32_1 = arith.constant 0 : i32
    return %arg0, %c0_i32, %c0_i32_0 : i32, i32, i32
  }
  func.func @transform_3(%arg0: i32, %arg1: i32) -> (i32, i32, i32, i32) {
    %c0_i32 = arith.constant 0 : i32
    %c0_i32_0 = arith.constant 0 : i32
    %c0_i32_1 = arith.constant 0 : i32
    %c0_i32_2 = arith.constant 0 : i32
    return %arg0, %c0_i32, %c0_i32_0, %c0_i32_1 : i32, i32, i32, i32
  }
  func.func @transform_4(%arg0: i32, %arg1: i32) -> (i32, i32, i32, i32) {
    %c0_i32 = arith.constant 0 : i32
    %c0_i32_0 = arith.constant 0 : i32
    %c0_i32_1 = arith.constant 0 : i32
    %c0_i32_2 = arith.constant 0 : i32
    return %arg0, %c0_i32, %c0_i32_0, %c0_i32_1 : i32, i32, i32, i32
  }
  func.func @transform_5(%arg0: i32, %arg1: i32) -> (i32, i32, i32) {
    %c0_i32 = arith.constant 0 : i32
    %c0_i32_0 = arith.constant 0 : i32
    %c0_i32_1 = arith.constant 0 : i32
    return %arg0, %c0_i32, %c0_i32_0 : i32, i32, i32
  }
}

</mosaic_0001>

<llo_original>
// kernel: tpu_custom_call.1
$region0: #{tpu_custom_call.1}
  #allocation0 [shape = 'u32[]', space=smem, size = 0x4, offset = 0x4, fixed_abs, tag = 'smem constant byte address 0x4 - core index']
  #allocation1 [shape = 'u32[72,128]{1,0:T(1,128)}', space=vmem, size = 0x9000, scoped, tag = 'internal scratch']
  %s0 = inlined_call_operand.hbm [shape: f32[2,4,16,128], index: 0, kind: input, shape index: {}]
  %s1 = inlined_call_operand.hbm [shape: f32[2,16,128], index: 1, kind: input, shape index: {}]
  %s2 = inlined_call_operand.hbm [shape: f32[2,8,128], index: 2, kind: output, shape index: {0}]
  %s3 = inlined_call_operand.hbm [shape: f32[2,4,8,128], index: 3, kind: output, shape index: {1}]
  %s4 = inlined_call_operand.hbm [shape: f32[2,4,8,128], index: 4, kind: output, shape index: {2}]
  %s5 = inlined_call_operand.hbm [shape: f32[2,8,128], index: 5, kind: output, shape index: {3}]
  %6 = xla_tuple %s2, %s3, %s4, %s5
  %s7 = sld [smem:[#allocation0]]
  $region77: #{tpu_custom_call.1} parent=0
    _
  %s9 = ssub.s32 1, %s7
  %s10 = scalar_select 0, %s9, %s7
  $region1: #{tpu_custom_call.1} parent=0
    #allocation2 [shape = 'u8[65536]{0}', space=vmem, size = 0x10000, scoped, tag = 'input window, operand 0']
    #allocation3 [shape = 's32[2]{0}', space=sflag, size = 0x8, scoped, tag = 'scoped memory for tpu_custom_call.1']
    #allocation4 [shape = 's32[2]{0}', space=sflag, size = 0x8, scoped, tag = 'scoped memory for tpu_custom_call.1']
    #allocation5 [shape = 'u8[16384]{0}', space=vmem, size = 0x4000, scoped, tag = 'input window, operand 1']
    #allocation6 [shape = 's32[2]{0}', space=sflag, size = 0x8, scoped, tag = 'scoped memory for tpu_custom_call.1']
    #allocation7 [shape = 'u8[8192]{0}', space=vmem, size = 0x2000, scoped, tag = 'output window, operand 0']
    #allocation8 [shape = 'u8[32768]{0}', space=vmem, size = 0x8000, scoped, tag = 'output window, operand 1']
    #allocation9 [shape = 's32[2]{0}', space=sflag, size = 0x8, scoped, tag = 'scoped memory for tpu_custom_call.1']
    #allocation10 [shape = 'u8[32768]{0}', space=vmem, size = 0x8000, scoped, tag = 'output window, operand 2']
    #allocation11 [shape = 'u8[8192]{0}', space=vmem, size = 0x2000, scoped, tag = 'output window, operand 3']
    #allocation12 [shape = 's32[2]{0}', space=sflag, size = 0x8, scoped, tag = 'scoped memory for tpu_custom_call.1']
    %11 = vsyncpa [#allocation3], 0
    %s12 = scalar_lea.sflag [#allocation3], 1
    %13 = vsyncpa %s12, 0
    %14 = vsyncpa [#allocation6], 0
    %s15 = scalar_lea.sflag [#allocation6], 1
    %16 = vsyncpa %s15, 0
    %17 = vsyncpa [#allocation4], 0
    %s18 = scalar_lea.sflag [#allocation4], 1
    %19 = vsyncpa %s18, 0
    %20 = vsyncpa [#allocation9], 0
    %s21 = scalar_lea.sflag [#allocation9], 1
    %22 = vsyncpa %s21, 0
    %23 = vsyncpa [#allocation12], 0
    %s24 = scalar_lea.sflag [#allocation12], 1
    %25 = vsyncpa %s24, 0
    loop: start=0, step=1, limit=4
    $region2: #{tpu_custom_call.1} parent=1 // loop_pre_header
      _
    $region3: #{tpu_custom_call.1} parent=1 // loop_header
      %s27 = sphi 0, %s31
      %p28 = scmp.ge.s32.totalorder %s27, 4
      %s34 = sphi 0, %s46
      %s35 = sphi 0, %s42
      %s36 = sphi 0, %s34
      %s37 = sphi 0, %s35
      %s38 = sphi 0, %s36
      %s39 = sphi 0, %s37
      %s51 = sphi 0, %s53
      %s54 = sphi 0, %s51
      %s55 = sphi 0, %s54
      %s71 = sphi 0, %s55
      %s79 = sphi 0, %s81
      %s82 = sphi 0, %s79
      %s83 = sphi 0, %s82
      %s99 = sphi 0, %s83
      %s105 = sphi 0, %s107
      %s108 = sphi 0, %s105
      %s109 = sphi 0, %s108
      %s125 = sphi 0, %s109
      %s131 = sphi 0, %s133
      %s134 = sphi 0, %s131
      %s135 = sphi 0, %s134
      %s151 = sphi 0, %s135
      %s157 = sphi 0, %s159
      %s160 = sphi 0, %s157
      %s161 = sphi 0, %s160
      %s177 = sphi 0, %s161
      %s183 = sphi 0, %s185
      %s186 = sphi 0, %s183
      %s187 = sphi 0, %s186
      %s203 = sphi 0, %s187
    $region4: #{tpu_custom_call.1} parent=1 // loop_header_branch
      %30 = sbr.rel (%p28) target = $region8
    $region5: #{tpu_custom_call.1} parent=1 // loop_body
      %s32 = ssub.s32 %s27, 1
      %s33 = ssub.s32 %s27, 2
      %s40 = sadd.s32 1, %s35
      %p41 = scmp.ge.s32.totalorder %s40, 1
      %s42 = scalar_select %p41, 0, %s40
      %s43 = sadd.s32 1, %s34
      %s44 = scalar_select %p41, %s43, %s34
      %p45 = scmp.ge.s32.totalorder %s44, 2
      %s46 = scalar_select %p45, 0, %s44
      %s47 = ssub.s32 %s34, %s46
      %s48 = ssub.s32 %s35, %s42
      %s49 = sor.u32 %s47, %s48
      %p50 = scmp.eq.s32.totalorder %s49, 0
      %s52 = sadd.s32 %s51, 1
      %s53 = scalar_select %p50, %s51, %s52
      %p56 = pneg %p50
      %p57 = scmp.eq.s32.totalorder %s27, 1
      %p58 = por %p56, %p57
      %p59 = scmp.ne.s32.totalorder %s51, %s54
      %p60 = scmp.eq.s32.totalorder %s27, 0
      %p61 = por %p59, %p60
      %p62 = scmp.ne.s32.totalorder %s51, %s54
      %p63 = scmp.eq.s32.totalorder %s32, 1
      %p64 = por %p62, %p63
      %p65 = scmp.ne.s32.totalorder %s54, %s55
      %p66 = scmp.eq.s32.totalorder %s32, 0
      %p67 = por %p65, %p66
      %p68 = scmp.ne.s32.totalorder %s54, %s55
      %p69 = scmp.eq.s32.totalorder %s33, 1
      %p70 = por %p68, %p69
      %p72 = scmp.ne.s32.totalorder %s55, %s71
      %p73 = scmp.eq.s32.totalorder %s33, 0
      %p74 = por %p72, %p73
      %s75 = ssub.s32 %s34, %s46
      %s76 = ssub.s32 %s35, %s42
      %s77 = sor.u32 %s75, %s76
      %p78 = scmp.eq.s32.totalorder %s77, 0
      %s80 = sadd.s32 %s79, 1
      %s81 = scalar_select %p78, %s79, %s80
      %p84 = pneg %p78
      %p85 = scmp.eq.s32.totalorder %s27, 1
      %p86 = por %p84, %p85
      %p87 = scmp.ne.s32.totalorder %s79, %s82
      %p88 = scmp.eq.s32.totalorder %s27, 0
      %p89 = por %p87, %p88
      %p90 = scmp.ne.s32.totalorder %s79, %s82
      %p91 = scmp.eq.s32.totalorder %s32, 1
      %p92 = por %p90, %p91
      %p93 = scmp.ne.s32.totalorder %s82, %s83
      %p94 = scmp.eq.s32.totalorder %s32, 0
      %p95 = por %p93, %p94
      %p96 = scmp.ne.s32.totalorder %s82, %s83
      %p97 = scmp.eq.s32.totalorder %s33, 1
      %p98 = por %p96, %p97
      %p100 = scmp.ne.s32.totalorder %s83, %s99
      %p101 = scmp.eq.s32.totalorder %s33, 0
      %p102 = por %p100, %p101
      %s103 = ssub.s32 %s34, %s46
      %p104 = scmp.eq.s32.totalorder %s103, 0
      %s106 = sadd.s32 %s105, 1
      %s107 = scalar_select %p104, %s105, %s106
      %p110 = pneg %p104
      %p111 = scmp.eq.s32.totalorder %s27, 1
      %p112 = por %p110, %p111
      %p113 = scmp.ne.s32.totalorder %s105, %s108
      %p114 = scmp.eq.s32.totalorder %s27, 0
      %p115 = por %p113, %p114
      %p116 = scmp.ne.s32.totalorder %s105, %s108
      %p117 = scmp.eq.s32.totalorder %s32, 1
      %p118 = por %p116, %p117
      %p119 = scmp.ne.s32.totalorder %s108, %s109
      %p120 = scmp.eq.s32.totalorder %s32, 0
      %p121 = por %p119, %p120
      %p122 = scmp.ne.s32.totalorder %s108, %s109
      %p123 = scmp.eq.s32.totalorder %s33, 1
      %p124 = por %p122, %p123
      %p126 = scmp.ne.s32.totalorder %s109, %s125
      %p127 = scmp.eq.s32.totalorder %s33, 0
      %p128 = por %p126, %p127
      %s129 = ssub.s32 %s34, %s46
      %p130 = scmp.eq.s32.totalorder %s129, 0
      %s132 = sadd.s32 %s131, 1
      %s133 = scalar_select %p130, %s131, %s132
      %p136 = pneg %p130
      %p137 = scmp.eq.s32.totalorder %s27, 1
      %p138 = por %p136, %p137
      %p139 = scmp.ne.s32.totalorder %s131, %s134
      %p140 = scmp.eq.s32.totalorder %s27, 0
      %p141 = por %p139, %p140
      %p142 = scmp.ne.s32.totalorder %s131, %s134
      %p143 = scmp.eq.s32.totalorder %s32, 1
      %p144 = por %p142, %p143
      %p145 = scmp.ne.s32.totalorder %s134, %s135
      %p146 = scmp.eq.s32.totalorder %s32, 0
      %p147 = por %p145, %p146
      %p148 = scmp.ne.s32.totalorder %s134, %s135
      %p149 = scmp.eq.s32.totalorder %s33, 1
      %p150 = por %p148, %p149
      %p152 = scmp.ne.s32.totalorder %s135, %s151
      %p153 = scmp.eq.s32.totalorder %s33, 0
      %p154 = por %p152, %p153
      %s155 = ssub.s32 %s34, %s46
      %p156 = scmp.eq.s32.totalorder %s155, 0
      %s158 = sadd.s32 %s157, 1
      %s159 = scalar_select %p156, %s157, %s158
      %p162 = pneg %p156
      %p163 = scmp.eq.s32.totalorder %s27, 1
      %p164 = por %p162, %p163
      %p165 = scmp.ne.s32.totalorder %s157, %s160
      %p166 = scmp.eq.s32.totalorder %s27, 0
      %p167 = por %p165, %p166
      %p168 = scmp.ne.s32.totalorder %s157, %s160
      %p169 = scmp.eq.s32.totalorder %s32, 1
      %p170 = por %p168, %p169
      %p171 = scmp.ne.s32.totalorder %s160, %s161
      %p172 = scmp.eq.s32.totalorder %s32, 0
      %p173 = por %p171, %p172
      %p174 = scmp.ne.s32.totalorder %s160, %s161
      %p175 = scmp.eq.s32.totalorder %s33, 1
      %p176 = por %p174, %p175
      %p178 = scmp.ne.s32.totalorder %s161, %s177
      %p179 = scmp.eq.s32.totalorder %s33, 0
      %p180 = por %p178, %p179
      %s181 = ssub.s32 %s34, %s46
      %p182 = scmp.eq.s32.totalorder %s181, 0
      %s184 = sadd.s32 %s183, 1
      %s185 = scalar_select %p182, %s183, %s184
      %p188 = pneg %p182
      %p189 = scmp.eq.s32.totalorder %s27, 1
      %p190 = por %p188, %p189
      %p191 = scmp.ne.s32.totalorder %s183, %s186
      %p192 = scmp.eq.s32.totalorder %s27, 0
      %p193 = por %p191, %p192
      %p194 = scmp.ne.s32.totalorder %s183, %s186
      %p195 = scmp.eq.s32.totalorder %s32, 1
      %p196 = por %p194, %p195
      %p197 = scmp.ne.s32.totalorder %s186, %s187
      %p198 = scmp.eq.s32.totalorder %s32, 0
      %p199 = por %p197, %p198
      %p200 = scmp.ne.s32.totalorder %s186, %s187
      %p201 = scmp.eq.s32.totalorder %s33, 1
      %p202 = por %p200, %p201
      %p204 = scmp.ne.s32.totalorder %s187, %s203
      %p205 = scmp.eq.s32.totalorder %s33, 0
      %p206 = por %p204, %p205
      %p207 = scmp.le.s32.totalorder 1, %s27
      %p208 = scmp.lt.s32.totalorder %s27, 3
      %p209 = pnand %p207, %p208
      %p210 = pneg %p209
      // Predicated region
      $region9: #{tpu_custom_call.1} parent=5 // pred_check
        _
      $region10: #{tpu_custom_call.1} parent=5 // pred_check_branch
        %212 = sbr.rel (%p209) target = $region12
      $region11: #{tpu_custom_call.1} parent=5 // pred_region
        %s213 = ssub.s32 %s27, 1
      $region12: #{tpu_custom_call.1} parent=5 // pred_fallthru
        _
      %p214 = scmp.lt.s32.totalorder %s27, 2
      // Predicated region
      $region13: #{tpu_custom_call.1} parent=5 // pred_check
        %p215 = pneg %p214
      $region14: #{tpu_custom_call.1} parent=5 // pred_check_branch
        %217 = sbr.rel (%p215) target = $region16
      $region15: #{tpu_custom_call.1} parent=5 // pred_region
        // Predicated region
        $region17: #{tpu_custom_call.1} parent=15 // pred_check
          %p218 = pneg %p61
        $region18: #{tpu_custom_call.1} parent=15 // pred_check_branch
          %220 = sbr.rel (%p218) target = $region20
        $region19: #{tpu_custom_call.1} parent=15 // pred_region
          %s221 = sand.u32 %s51, 1
          %s222 = scalar_lea.sflag [#allocation3], %s221
          %s223 = sand.u32 %s51, 1
          %s224 = smul.addr %s223, 64
          %s225 = scalar_lea.vmem [#allocation2], %s224
          %s226 = smul.u32 2, %s35
          %228 = vsyncadd %s222, 0
          %s229 = smul.addr %s34, 8
          %s230 = sadd.s32 %s226, %s229
          %s231 = smul.addr %s230, 8
          %s232 = scalar_lea.hbm %s0, %s231
          %s233 = sshll.u32 %s232, 4
          %s234 = int_to_ptr.hbm [resolvable:$true] %s233
          %s235 = sshll.u32 %s225, 4
          %s236 = int_to_ptr.vmem [resolvable:$true] %s235
          %241 = dma.hbm_to_vmem [thread:$0]  %s234, 1024, %s236, %s222, 128, 128, 8
        $region20: #{tpu_custom_call.1} parent=15 // pred_fallthru
          _
        // Predicated region
        $region21: #{tpu_custom_call.1} parent=15 // pred_check
          %p242 = pneg %p89
        $region22: #{tpu_custom_call.1} parent=15 // pred_check_branch
          %244 = sbr.rel (%p242) target = $region24
        $region23: #{tpu_custom_call.1} parent=15 // pred_region
          %s245 = sand.u32 %s79, 1
          %s246 = scalar_lea.sflag [#allocation6], %s245
          %s247 = sand.u32 %s79, 1
          %s248 = smul.addr %s247, 16
          %s249 = scalar_lea.vmem [#allocation5], %s248
          %s250 = smul.u32 2, %s35
          %252 = vsyncadd %s246, 0
          %s253 = smul.addr %s34, 2
          %s254 = sadd.s32 %s250, %s253
          %s255 = smul.addr %s254, 8
          %s256 = scalar_lea.hbm %s1, %s255
          %s257 = sshll.u32 %s256, 4
          %s258 = int_to_ptr.hbm [resolvable:$true] %s257
          %s259 = sshll.u32 %s249, 4
          %s260 = int_to_ptr.vmem [resolvable:$true] %s259
          %265 = dma.hbm_to_vmem [thread:$0]  %s258, 256, %s260, %s246, 128, 128, 8
        $region24: #{tpu_custom_call.1} parent=15 // pred_fallthru
          _
      $region16: #{tpu_custom_call.1} parent=5 // pred_fallthru
        _
      %p266 = scmp.le.s32.totalorder 1, %s27
      %p267 = scmp.lt.s32.totalorder %s27, 3
      %p268 = pnand %p266, %p267
      %p269 = pneg %p268
      // Predicated region
      $region25: #{tpu_custom_call.1} parent=5 // pred_check
        _
      $region26: #{tpu_custom_call.1} parent=5 // pred_check_branch
        %271 = sbr.rel (%p268) target = $region28
      $region27: #{tpu_custom_call.1} parent=5 // pred_region
        %s272 = ssub.s32 %s27, 1
        %s273 = sand.u32 %s54, 1
        %s274 = scalar_lea.sflag [#allocation3], %s273
        %s275 = sand.u32 %s54, 1
        %s276 = smul.addr %s275, 64
        %s277 = scalar_lea.vmem [#allocation2], %s276
        // Predicated region
        $region29: #{tpu_custom_call.1} parent=27 // pred_check
          %p278 = pneg %p67
        $region30: #{tpu_custom_call.1} parent=27 // pred_check_branch
          %280 = sbr.rel (%p278) target = $region32
        $region31: #{tpu_custom_call.1} parent=27 // pred_region
          %282 = dma.done %s274, 1024
        $region32: #{tpu_custom_call.1} parent=27 // pred_fallthru
          _
        %s283 = sand.u32 %s82, 1
        %s284 = scalar_lea.sflag [#allocation6], %s283
        %s285 = sand.u32 %s82, 1
        %s286 = smul.addr %s285, 16
        %s287 = scalar_lea.vmem [#allocation5], %s286
        // Predicated region
        $region33: #{tpu_custom_call.1} parent=27 // pred_check
          %p288 = pneg %p95
        $region34: #{tpu_custom_call.1} parent=27 // pred_check_branch
          %290 = sbr.rel (%p288) target = $region36
        $region35: #{tpu_custom_call.1} parent=27 // pred_region
          %292 = dma.done %s284, 256
        $region36: #{tpu_custom_call.1} parent=27 // pred_fallthru
          _
        %s293 = sand.u32 %s54, 1
        %s294 = scalar_lea.sflag [#allocation3], %s293
        %s295 = sand.u32 %s54, 1
        %s296 = smul.addr %s295, 64
        %s297 = scalar_lea.vmem [#allocation2], %s296
        %p298 = pneg %p67
        %p299 = pneg %p64
        %s300 = sand.u32 %s82, 1
        %s301 = scalar_lea.sflag [#allocation6], %s300
        %s302 = sand.u32 %s82, 1
        %s303 = smul.addr %s302, 16
        %s304 = scalar_lea.vmem [#allocation5], %s303
        %p305 = pneg %p95
        %p306 = pneg %p92
        %p307 = pneg %p121
        %p308 = pneg %p118
        %s309 = sand.u32 %s108, 1
        %s310 = scalar_lea.sflag [#allocation4], %s309
        %s311 = sand.u32 %s108, 1
        %s312 = smul.addr %s311, 8
        %s313 = scalar_lea.vmem [#allocation7], %s312
        %p314 = pneg %p147
        %p315 = pneg %p144
        %s316 = sand.u32 %s32, 1
        %s317 = scalar_lea.sflag [#allocation9], %s316
        %s318 = sand.u32 %s134, 1
        %s319 = smul.addr %s318, 32
        %s320 = scalar_lea.vmem [#allocation8], %s319
        %p321 = pneg %p173
        %p322 = pneg %p170
        %s323 = sand.u32 %s32, 1
        %s324 = scalar_lea.sflag [#allocation9], %s323
        %s325 = sand.u32 %s160, 1
        %s326 = smul.addr %s325, 32
        %s327 = scalar_lea.vmem [#allocation10], %s326
        %p328 = pneg %p199
        %p329 = pneg %p196
        %s330 = sand.u32 %s186, 1
        %s331 = scalar_lea.sflag [#allocation12], %s330
        %s332 = sand.u32 %s186, 1
        %s333 = smul.addr %s332, 8
        %s334 = scalar_lea.vmem [#allocation11], %s333
        %s335 = smul.u32 2, %s37
        %s336 = smul.u32 2, %s37
        %p337 = scmp.eq.s32.totalorder %s37, 0
        // Predicated region
        $region37: #{tpu_custom_call.1} parent=27 // pred_check
          %p338 = pneg %p337
        $region38: #{tpu_custom_call.1} parent=27 // pred_check_branch
          %340 = sbr.rel (%p338) target = $region40
        $region39: #{tpu_custom_call.1} parent=27 // pred_region
          %341 = vst [vmem:[%s313] sm:$0xff] 0.0
          %342 = vst [vmem:[%s320] sm:$0xff] 0.0
          %343 = vst [vmem:[%s320 + $0x8] sm:$0xff] 0.0
          %344 = vst [vmem:[%s320 + $0x10] sm:$0xff] 0.0
          %345 = vst [vmem:[%s320 + $0x18] sm:$0xff] 0.0
          %346 = vst [vmem:[%s327] sm:$0xff] 0.0
          %347 = vst [vmem:[%s327 + $0x8] sm:$0xff] 0.0
          %348 = vst [vmem:[%s327 + $0x10] sm:$0xff] 0.0
          %349 = vst [vmem:[%s327 + $0x18] sm:$0xff] 0.0
          %350 = vst [vmem:[%s334] sm:$0xff] 0.0
        $region40: #{tpu_custom_call.1} parent=27 // pred_fallthru
          _
        %v351 = vld [vmem:[%s277] sm:$0xff]
        %v352 = vld [vmem:[%s277 + $0x8] sm:$0xff]
        %v353 = vld [vmem:[%s277 + $0x10] sm:$0xff]
        %v354 = vld [vmem:[%s277 + $0x18] sm:$0xff]
        %v355 = vld [vmem:[%s277 + $0x20] sm:$0xff]
        %v356 = vld [vmem:[%s277 + $0x28] sm:$0xff]
        %v357 = vld [vmem:[%s277 + $0x30] sm:$0xff]
        %v358 = vld [vmem:[%s277 + $0x38] sm:$0xff]
        %v359 = vld [vmem:[%s287] sm:$0xff]
        %v360 = vld [vmem:[%s287 + $0x8] sm:$0xff]
        %v361 = vmax.f32 %v351, %v355
        %v362 = vmax.f32 %v353, %v357
        %v363 = vmax.f32 %v361, %v362
        %v364 = vmax.f32 %v352, %v356
        %v365 = vmax.f32 %v354, %v358
        %v366 = vmax.f32 %v364, %v365
        %v367 = vsub.f32 %v351, %v363
        %v368 = vsub.f32 %v352, %v366
        %v369 = vsub.f32 %v353, %v363
        %v370 = vsub.f32 %v354, %v366
        %v371 = vsub.f32 %v355, %v363
        %v372 = vsub.f32 %v356, %v366
        %v373 = vsub.f32 %v357, %v363
        %v374 = vsub.f32 %v358, %v366
        %v375 = vmul.f32 %v367, 1.442695
        %v376 = vpow.pop %v375
        %v377 = vmul.f32 %v368, 1.442695
        %v378 = vpow.pop %v377
        %v379 = vmul.f32 %v369, 1.442695
        %v380 = vpow.pop %v379
        %v381 = vmul.f32 %v370, 1.442695
        %v382 = vpow.pop %v381
        %v383 = vmul.f32 %v371, 1.442695
        %v384 = vpow.pop %v383
        %v385 = vmul.f32 %v372, 1.442695
        %v386 = vpow.pop %v385
        %v387 = vmul.f32 %v373, 1.442695
        %v388 = vpow.pop %v387
        %v389 = vmul.f32 %v374, 1.442695
        %v390 = vpow.pop %v389
        %v391 = vadd.f32 %v376, %v380
        %v392 = vadd.f32 %v391, %v384
        %v393 = vadd.f32 %v392, %v388
        %v394 = vadd.f32 %v378, %v382
        %v395 = vadd.f32 %v394, %v386
        %v396 = vadd.f32 %v395, %v390
        %v397 = vlog2.pop %v393
        %v398 = vmul.f32 %v397, 0.6931472
        %v399 = vlog2.pop %v396
        %v400 = vmul.f32 %v399, 0.6931472
        %v401 = vadd.f32 %v363, %v398
        %v402 = vadd.f32 %v366, %v400
        %v403 = vrcp.pop %v393
        %v404 = vmul.f32 %v393, %v403
        %v405 = vsub.f32 1.0, %v404
        %v406 = vmul.f32 %v403, %v405
        %v407 = vadd.f32 %v403, %v406
        %vm408 = vweird.f32 %v393
        %vm409 = vweird.f32 %v403
        %vm410 = vmor %vm408, %vm409
        %v411 = vsel %vm410, %v403, %v407
        %v412 = vand.u32 2147483647, %v393
        %vm413 = vcmp.eq.f32.partialorder %v412, 8.507059e+37
        %v414 = vand.u32 %v393, 2147483648
        %v415 = vor.u32 1.1754944e-38, %v414
        %v416 = vsel %vm413, %v415, %v411
        %v417 = vrcp.pop %v396
        %v418 = vmul.f32 %v396, %v417
        %v419 = vsub.f32 1.0, %v418
        %v420 = vmul.f32 %v417, %v419
        %v421 = vadd.f32 %v417, %v420
        %vm422 = vweird.f32 %v396
        %vm423 = vweird.f32 %v417
        %vm424 = vmor %vm422, %vm423
        %v425 = vsel %vm424, %v417, %v421
        %v426 = vand.u32 2147483647, %v396
        %vm427 = vcmp.eq.f32.partialorder %v426, 8.507059e+37
        %v428 = vand.u32 %v396, 2147483648
        %v429 = vor.u32 1.1754944e-38, %v428
        %v430 = vsel %vm427, %v429, %v425
        %v431 = vmul.f32 %v376, %v416
        %v432 = vmul.f32 %v378, %v430
        %v433 = vmul.f32 %v380, %v416
        %v434 = vmul.f32 %v382, %v430
        %v435 = vmul.f32 %v384, %v416
        %v436 = vmul.f32 %v386, %v430
        %v437 = vmul.f32 %v388, %v416
        %v438 = vmul.f32 %v390, %v430
        %v439 = vcvt.f32.s32.to.zero.pseudo %v359
        %v440 = vcvt.f32.s32.to.zero.pseudo %v360
        %vm441 = vcmp.eq.s32.totalorder %v439, 0
        %vm442 = vcmp.eq.s32.totalorder %v440, 0
        %vm443 = vcmp.eq.s32.totalorder %v439, 1
        %vm444 = vcmp.eq.s32.totalorder %v440, 1
        %vm445 = vcmp.eq.s32.totalorder %v439, 2
        %vm446 = vcmp.eq.s32.totalorder %v440, 2
        %vm447 = vcmp.eq.s32.totalorder %v439, 3
        %vm448 = vcmp.eq.s32.totalorder %v440, 3
        %v449 = vsel %vm441, %v351, 0.0
        %v450 = vsel %vm442, %v352, 0.0
        %v451 = vsel %vm443, %v353, 0.0
        %v452 = vsel %vm444, %v354, 0.0
        %v453 = vsel %vm445, %v355, 0.0
        %v454 = vsel %vm446, %v356, 0.0
        %v455 = vsel %vm447, %v357, 0.0
        %v456 = vsel %vm448, %v358, 0.0
        %v457 = vadd.f32 %v449, %v451
        %v458 = vadd.f32 %v457, %v453
        %v459 = vadd.f32 %v458, %v455
        %v460 = vadd.f32 %v450, %v452
        %v461 = vadd.f32 %v460, %v454
        %v462 = vadd.f32 %v461, %v456
        %v463 = vsub.f32 %v401, %v459
        %v464 = vsub.f32 %v402, %v462
        %v465 = vlaneseq
        %v466 = vshrl.u32 %v465, 7
        %v467 = vadd.s32 %v466, 8
        %v468 = vlaneseq
        %v469 = vand.u32 %v468, 127
        %s470 = smul.u32 %s37, 16
        %v471 = vstv %s470
        %v472 = vadd.s32 %v471, %v466
        %v473 = vadd.s32 %v471, %v467
        %v474 = vmul.u32 %v472, 128
        %v475 = vmul.u32 %v473, 128
        %v476 = vadd.s32 %v474, %v469
        %v477 = vadd.s32 %v475, %v469
        %vm478 = vcmp.lt.s32.totalorder %v476, 256
        %vm479 = vcmp.lt.s32.totalorder %v477, 256
        %v480 = vsel %vm478, 1, 0
        %v481 = vsel %vm479, 1, 0
        %v482 = vcvt.s32.f32 %v480
        %v483 = vcvt.s32.f32 %v481
        %v484 = vmul.f32 %v463, %v482
        %v485 = vmul.f32 %v464, %v483
        %v486 = vmul.f32 %v431, %v482
        %v487 = vmul.f32 %v432, %v483
        %v488 = vmul.f32 %v433, %v482
        %v489 = vmul.f32 %v434, %v483
        %v490 = vmul.f32 %v435, %v482
        %v491 = vmul.f32 %v436, %v483
        %v492 = vmul.f32 %v437, %v482
        %v493 = vmul.f32 %v438, %v483
        %v494 = vmul.f32 %v359, %v482
        %v495 = vmul.f32 %v360, %v483
        %v496 = vld [vmem:[%s313] sm:$0xff]
        %v497 = vadd.f32 %v484, %v485
        %v498 = vadd.f32 %v496, %v497
        %499 = vst [vmem:[%s313] sm:$0xff] %v498
        %v500 = vld [vmem:[%s320] sm:$0xff]
        %v501 = vld [vmem:[%s320 + $0x8] sm:$0xff]
        %v502 = vld [vmem:[%s320 + $0x10] sm:$0xff]
        %v503 = vld [vmem:[%s320 + $0x18] sm:$0xff]
        %v504 = vmul.f32 %v486, %v494
        %v505 = vmul.f32 %v487, %v495
        %v506 = vmul.f32 %v488, %v494
        %v507 = vmul.f32 %v489, %v495
        %v508 = vmul.f32 %v490, %v494
        %v509 = vmul.f32 %v491, %v495
        %v510 = vmul.f32 %v492, %v494
        %v511 = vmul.f32 %v493, %v495
        %v512 = vadd.f32 %v504, %v505
        %v513 = vadd.f32 %v506, %v507
        %v514 = vadd.f32 %v508, %v509
        %v515 = vadd.f32 %v510, %v511
        %v516 = vadd.f32 %v500, %v512
        %v517 = vadd.f32 %v501, %v513
        %v518 = vadd.f32 %v502, %v514
        %v519 = vadd.f32 %v503, %v515
        %520 = vst [vmem:[%s320] sm:$0xff] %v516
        %521 = vst [vmem:[%s320 + $0x8] sm:$0xff] %v517
        %522 = vst [vmem:[%s320 + $0x10] sm:$0xff] %v518
        %523 = vst [vmem:[%s320 + $0x18] sm:$0xff] %v519
        %v524 = vld [vmem:[%s327] sm:$0xff]
        %v525 = vld [vmem:[%s327 + $0x8] sm:$0xff]
        %v526 = vld [vmem:[%s327 + $0x10] sm:$0xff]
        %v527 = vld [vmem:[%s327 + $0x18] sm:$0xff]
        %v528 = vadd.f32 %v486, %v487
        %v529 = vadd.f32 %v488, %v489
        %v530 = vadd.f32 %v490, %v491
        %v531 = vadd.f32 %v492, %v493
        %v532 = vadd.f32 %v524, %v528
        %v533 = vadd.f32 %v525, %v529
        %v534 = vadd.f32 %v526, %v530
        %v535 = vadd.f32 %v527, %v531
        %536 = vst [vmem:[%s327] sm:$0xff] %v532
        %537 = vst [vmem:[%s327 + $0x8] sm:$0xff] %v533
        %538 = vst [vmem:[%s327 + $0x10] sm:$0xff] %v534
        %539 = vst [vmem:[%s327 + $0x18] sm:$0xff] %v535
        %v540 = vld [vmem:[%s334] sm:$0xff]
        %v541 = vadd.f32 %v494, %v495
        %v542 = vadd.f32 %v540, %v541
        %543 = vst [vmem:[%s334] sm:$0xff] %v542
        %s544 = sand.u32 %s108, 1
        %s545 = scalar_lea.sflag [#allocation4], %s544
        %s546 = sand.u32 %s108, 1
        %s547 = smul.addr %s546, 8
        %s548 = scalar_lea.vmem [#allocation7], %s547
        %s549 = sand.u32 %s32, 1
        %s550 = scalar_lea.sflag [#allocation9], %s549
        %s551 = sand.u32 %s134, 1
        %s552 = smul.addr %s551, 32
        %s553 = scalar_lea.vmem [#allocation8], %s552
        %s554 = sand.u32 %s32, 1
        %s555 = scalar_lea.sflag [#allocation9], %s554
        %s556 = sand.u32 %s160, 1
        %s557 = smul.addr %s556, 32
        %s558 = scalar_lea.vmem [#allocation10], %s557
        %s559 = sand.u32 %s186, 1
        %s560 = scalar_lea.sflag [#allocation12], %s559
        %s561 = sand.u32 %s186, 1
        %s562 = smul.addr %s561, 8
        %s563 = scalar_lea.vmem [#allocation11], %s562
        // Predicated region
        $region41: #{tpu_custom_call.1} parent=27 // pred_check
          %p564 = pneg %p118
        $region42: #{tpu_custom_call.1} parent=27 // pred_check_branch
          %566 = sbr.rel (%p564) target = $region44
        $region43: #{tpu_custom_call.1} parent=27 // pred_region
          %568 = vsyncadd %s545, 0
          %s569 = smul.addr %s36, 8
          %s570 = scalar_lea.hbm %s2, %s569
          %s572 = sshll.u32 %s548, 4
          %s573 = int_to_ptr.vmem [resolvable:$true] %s572
          %s574 = sshll.u32 %s570, 4
          %s575 = int_to_ptr.hbm [resolvable:$true] %s574
          %577 = dma.vmem_to_hbm [thread:$0]  %s573, 128, %s575, %s545
        $region44: #{tpu_custom_call.1} parent=27 // pred_fallthru
          _
        // Predicated region
        $region45: #{tpu_custom_call.1} parent=27 // pred_check
          %p578 = pneg %p144
        $region46: #{tpu_custom_call.1} parent=27 // pred_check_branch
          %580 = sbr.rel (%p578) target = $region48
        $region47: #{tpu_custom_call.1} parent=27 // pred_region
          %582 = vsyncadd %s550, 0
          %s583 = smul.addr %s36, 4
          %s584 = smul.addr %s583, 8
          %s585 = scalar_lea.hbm %s3, %s584
          %s586 = sshll.u32 %s553, 4
          %s587 = int_to_ptr.vmem [resolvable:$true] %s586
          %s588 = sshll.u32 %s585, 4
          %s589 = int_to_ptr.hbm [resolvable:$true] %s588
          %594 = dma.vmem_to_hbm [thread:$0]  %s587, 512, %s589, %s550, 128, 128, 8
        $region48: #{tpu_custom_call.1} parent=27 // pred_fallthru
          _
        // Predicated region
        $region49: #{tpu_custom_call.1} parent=27 // pred_check
          %p595 = pneg %p170
        $region50: #{tpu_custom_call.1} parent=27 // pred_check_branch
          %597 = sbr.rel (%p595) target = $region52
        $region51: #{tpu_custom_call.1} parent=27 // pred_region
          %599 = vsyncadd %s555, 0
          %s600 = smul.addr %s36, 4
          %s601 = smul.addr %s600, 8
          %s602 = scalar_lea.hbm %s4, %s601
          %s603 = sshll.u32 %s558, 4
          %s604 = int_to_ptr.vmem [resolvable:$true] %s603
          %s605 = sshll.u32 %s602, 4
          %s606 = int_to_ptr.hbm [resolvable:$true] %s605
          %611 = dma.vmem_to_hbm [thread:$0]  %s604, 512, %s606, %s555, 128, 128, 8
        $region52: #{tpu_custom_call.1} parent=27 // pred_fallthru
          _
        // Predicated region
        $region53: #{tpu_custom_call.1} parent=27 // pred_check
          %p612 = pneg %p196
        $region54: #{tpu_custom_call.1} parent=27 // pred_check_branch
          %614 = sbr.rel (%p612) target = $region56
        $region55: #{tpu_custom_call.1} parent=27 // pred_region
          %616 = vsyncadd %s560, 0
          %s617 = smul.addr %s36, 8
          %s618 = scalar_lea.hbm %s5, %s617
          %s620 = sshll.u32 %s563, 4
          %s621 = int_to_ptr.vmem [resolvable:$true] %s620
          %s622 = sshll.u32 %s618, 4
          %s623 = int_to_ptr.hbm [resolvable:$true] %s622
          %625 = dma.vmem_to_hbm [thread:$0]  %s621, 128, %s623, %s560
        $region56: #{tpu_custom_call.1} parent=27 // pred_fallthru
          _
      $region28: #{tpu_custom_call.1} parent=5 // pred_fallthru
        _
      %p626 = scmp.le.s32.totalorder 2, %s27
      // Predicated region
      $region57: #{tpu_custom_call.1} parent=5 // pred_check
        %p627 = pneg %p626
      $region58: #{tpu_custom_call.1} parent=5 // pred_check_branch
        %629 = sbr.rel (%p627) target = $region60
      $region59: #{tpu_custom_call.1} parent=5 // pred_region
        %s630 = ssub.s32 %s27, 2
        // Predicated region
        $region61: #{tpu_custom_call.1} parent=59 // pred_check
          %p631 = pneg %p124
        $region62: #{tpu_custom_call.1} parent=59 // pred_check_branch
          %633 = sbr.rel (%p631) target = $region64
        $region63: #{tpu_custom_call.1} parent=59 // pred_region
          %s634 = sand.u32 %s109, 1
          %s635 = scalar_lea.sflag [#allocation4], %s634
          %s636 = sand.u32 %s109, 1
          %s637 = smul.addr %s636, 8
          %s638 = scalar_lea.vmem [#allocation7], %s637
          %640 = dma.done %s635, 128
        $region64: #{tpu_custom_call.1} parent=59 // pred_fallthru
          _
        // Predicated region
        $region65: #{tpu_custom_call.1} parent=59 // pred_check
          %p641 = pneg %p150
        $region66: #{tpu_custom_call.1} parent=59 // pred_check_branch
          %643 = sbr.rel (%p641) target = $region68
        $region67: #{tpu_custom_call.1} parent=59 // pred_region
          %s644 = sand.u32 %s33, 1
          %s645 = scalar_lea.sflag [#allocation9], %s644
          %s646 = sand.u32 %s135, 1
          %s647 = smul.addr %s646, 32
          %s648 = scalar_lea.vmem [#allocation8], %s647
          %650 = dma.done %s645, 512
        $region68: #{tpu_custom_call.1} parent=59 // pred_fallthru
          _
        // Predicated region
        $region69: #{tpu_custom_call.1} parent=59 // pred_check
          %p651 = pneg %p176
        $region70: #{tpu_custom_call.1} parent=59 // pred_check_branch
          %653 = sbr.rel (%p651) target = $region72
        $region71: #{tpu_custom_call.1} parent=59 // pred_region
          %s654 = sand.u32 %s33, 1
          %s655 = scalar_lea.sflag [#allocation9], %s654
          %s656 = sand.u32 %s161, 1
          %s657 = smul.addr %s656, 32
          %s658 = scalar_lea.vmem [#allocation10], %s657
          %660 = dma.done %s655, 512
        $region72: #{tpu_custom_call.1} parent=59 // pred_fallthru
          _
        // Predicated region
        $region73: #{tpu_custom_call.1} parent=59 // pred_check
          %p661 = pneg %p202
        $region74: #{tpu_custom_call.1} parent=59 // pred_check_branch
          %663 = sbr.rel (%p661) target = $region76
        $region75: #{tpu_custom_call.1} parent=59 // pred_region
          %s664 = sand.u32 %s187, 1
          %s665 = scalar_lea.sflag [#allocation12], %s664
          %s666 = sand.u32 %s187, 1
          %s667 = smul.addr %s666, 8
          %s668 = scalar_lea.vmem [#allocation11], %s667
          %670 = dma.done %s665, 128
        $region76: #{tpu_custom_call.1} parent=59 // pred_fallthru
          _
      $region60: #{tpu_custom_call.1} parent=5 // pred_fallthru
        _
    $region6: #{tpu_custom_call.1} parent=1 // loop_footer
      %s31 = sadd.s32 1, %s27
    $region7: #{tpu_custom_call.1} parent=1 // loop_footer_branch
      %26 = sbr.rel target = $region3
    $region8: #{tpu_custom_call.1} parent=1 // loop_exit
      _
    %671 = vsyncpa [#allocation3], 1
    %s672 = scalar_lea.sflag [#allocation3], 1
    %673 = vsyncpa %s672, 1
    %674 = vsyncpa [#allocation6], 1
    %s675 = scalar_lea.sflag [#allocation6], 1
    %676 = vsyncpa %s675, 1
    %677 = vsyncpa [#allocation4], 1
    %s678 = scalar_lea.sflag [#allocation4], 1
    %679 = vsyncpa %s678, 1
    %680 = vsyncpa [#allocation9], 1
    %s681 = scalar_lea.sflag [#allocation9], 1
    %682 = vsyncpa %s681, 1
    %683 = vsyncpa [#allocation12], 1
    %s684 = scalar_lea.sflag [#allocation12], 1
    %685 = vsyncpa %s684, 1

</llo_original>
